<compile_context>
chip_gen: v7x
topology: tpu7x:2x2x1
jax: 0.10.0
libtpu: 0.0.40
codegen_flags: <defaults>
</compile_context>

<pallas_src>
import jax
import jax.numpy as jnp
from jax.experimental import pallas as pl
from jax.experimental.pallas import tpu as pltpu


def hba_kernel(ce_ref, seq_ref, bias_ref, w1t_ref, out_ref):
    tb, s, e = seq_ref.shape
    seq = seq_ref[...]                                   # (TB, S, E) original embeddings

    # W1 projection: one MXU matmul over the TB*S rows of this block.  S is a
    # multiple of 8, so the reshape does not cross (8,128) tiles (no relayout).
    sb = jnp.dot(seq.reshape(tb * s, e), w1t_ref[...],
                 preferred_element_type=jnp.float32).reshape(tb, s, e)

    # ce already holds cate@W2.T + b2 + b1 (both biases folded in the wrapper).
    x = sb + ce_ref[...][:, None, :]                     # (TB, S, E)

    # sum_e sigmoid(x) == 0.5*E + 0.5*sum_e tanh(x/2); the constant shift is
    # dropped (softmax is shift-invariant), leaving one EUP op per element.
    scores = 0.5 * jnp.sum(jnp.tanh(0.5 * x), axis=2)    # (TB, S)
    scores = scores + bias_ref[...]                      # additive -1e9 mask bias

    # Numerically-stable softmax, kept un-normalized: the final (TB, E) row is
    # rescaled once instead of dividing TB*S attention weights.
    m = jnp.max(scores, axis=1, keepdims=True)
    ex = jnp.exp(scores - m)                             # (TB, S)
    l = jnp.sum(ex, axis=1, keepdims=True)               # (TB, 1)

    if s <= 64:
        # Small S: VPU broadcast-multiply + reduce.  The batched einsum would
        # issue TB tiny M=1 MXU pushes, latency-bound through the MRF.
        acc = jnp.sum(ex[:, :, None] * seq, axis=1)      # (TB, E), f32
    else:
        acc = jnp.einsum("bs,bse->be", ex, seq,
                         preferred_element_type=jnp.float32)

    out_ref[...] = (acc * (1.0 / l)).astype(out_ref.dtype)


def _vmem_limit_bytes():
    """Scoped-VMEM limit: 3/4 of physical VMEM, capped at 96 MiB.

    v5e/v6e (128 MiB physical) -> 96 MiB; v7x (64 MiB per TensorCore) -> 48 MiB.
    """
    phys = 64 << 20
    try:
        info = pltpu.get_tpu_info()
        phys = int(getattr(info, "vmem_capacity_bytes", phys) or phys)
    except Exception:
        pass
    return int(min(phys * 3 // 4, 96 << 20))


def _choose_tb(batch, seq_len, itemsize, vmem_limit):
    """Batch rows per grid step, sized by VMEM bytes (not row count).

    The seq block occupies seq_len * 128 lanes per batch row in VMEM (E=32 is
    lane-padded to 128 by the (8,128) tiling) and the kernel keeps a few f32
    block-sized temporaries alive, so target ~1/8 of the scoped limit (<=4 MiB)
    for the block itself.  Per-step fixed cost is ~0.35 us, so multi-MiB blocks
    keep the pipeline at the HBM roofline.
    """
    row_bytes = seq_len * 128 * max(int(itemsize), 4)
    target = min(4 << 20, vmem_limit // 8)
    tb = max(1, target // row_bytes)
    tb = min(tb, batch)
    if batch >= 16:
        # Keep at least two grid steps so dimension_semantics=("parallel",)
        # can shard across the two TensorCores on v7x.
        tb = min(tb, pl.cdiv(batch, 2))
    if tb < batch:
        tb = max(8, (tb // 8) * 8)       # sublane-align the 2-D (tb, E) blocks
    return tb


def hierarchical_brand_attention(cate_embedding, seq_brand_embedding, mask,
                                 w1, b1, w2, b2):
    B, S, E = seq_brand_embedding.shape
    dtype = seq_brand_embedding.dtype

    # Hoisted W2 projection (one tiny XLA GEMM) with b1 folded in:
    #   (seq@W1.T + b1) + (cate@W2.T + b2) == seq@W1.T + (cate@W2.T + b2 + b1)
    ce = (jnp.dot(cate_embedding, w2.T, preferred_element_type=jnp.float32)
          + b2 + b1).astype(jnp.float32)                        # (B, E)

    # Additive mask bias: scores + (-1e9) at masked positions.  Equivalent to
    # masked_fill_ under softmax since |scores| <= E << 1e9.
    if mask is None:
        bias = jnp.zeros((B, S), jnp.float32)
    else:
        bias = jnp.where(mask, -1e9, 0.0).astype(jnp.float32)   # (B, S)

    # Pad S to a multiple of 8 so the in-kernel (tb,S,E)->(tb*S,E) reshape is a
    # layout no-op; padded positions get bias -1e9 -> ~0 attention weight.
    s_pad = max(8, pl.cdiv(S, 8) * 8)
    if s_pad != S:
        seq_brand_embedding = jnp.pad(seq_brand_embedding,
                                      ((0, 0), (0, s_pad - S), (0, 0)))
        bias = jnp.pad(bias, ((0, 0), (0, s_pad - S)), constant_values=-1e9)

    w1t = w1.T                                                  # (E, E), resident

    vmem_limit = _vmem_limit_bytes()
    tb = _choose_tb(B, s_pad, jnp.dtype(dtype).itemsize, vmem_limit)
    grid = (pl.cdiv(B, tb),)     # ragged last block OK: batch rows independent

    cost = pl.CostEstimate(
        flops=int(2 * B * s_pad * E * E + 6 * B * s_pad * E),
        transcendentals=int(B * s_pad * E + B * s_pad),
        bytes_accessed=int(jnp.dtype(dtype).itemsize * B * s_pad * E
                           + 4 * (2 * B * E + B * s_pad + E * E)),
    )

    out = pl.pallas_call(
        hba_kernel,
        out_shape=jax.ShapeDtypeStruct((B, E), dtype),
        grid=grid,
        in_specs=[
            pl.BlockSpec((tb, E), lambda i: (i, 0)),            # ce (W2 proj + b1 + b2)
            pl.BlockSpec((tb, s_pad, E), lambda i: (i, 0, 0)),  # seq_brand_embedding
            pl.BlockSpec((tb, s_pad), lambda i: (i, 0)),        # additive mask bias
            pl.BlockSpec((E, E), lambda i: (0, 0)),             # W1.T (replicated, resident)
        ],
        out_specs=pl.BlockSpec((tb, E), lambda i: (i, 0)),
        compiler_params=pltpu.CompilerParams(
            dimension_semantics=("parallel",),
            vmem_limit_bytes=vmem_limit),
        cost_estimate=cost,
    )(ce, seq_brand_embedding, bias, w1t)
    return out


def reference_forward(cate, seq, mask, w1, b1, w2, b2):
    sb = seq @ w1.T + b1                                        # (B, S, E)
    ce = cate @ w2.T + b2                                       # (B, E)
    scores = jax.nn.sigmoid(sb + ce[:, None, :]).sum(axis=2)    # (B, S)
    if mask is not None:
        scores = jnp.where(mask, jnp.float32(-1e9), scores)
    attn = jax.nn.softmax(scores, axis=-1)
    return (attn[:, :, None] * seq).sum(axis=1)                 # (B, E)


if __name__ == "__main__":
    B, S, E = 2, 8, 32
    key = jax.random.PRNGKey(0)
    k_cate, k_seq, k_w1, k_b1, k_w2, k_b2, k_mask = jax.random.split(key, 7)

    cate_embedding = jax.random.normal(k_cate, (B, E), dtype=jnp.float32)
    seq_brand_embedding = jax.random.normal(k_seq, (B, S, E), dtype=jnp.float32)
    mask = jax.random.bernoulli(k_mask, 0.25, (B, S))           # True => masked out
    # Keep at least one attended position per row (a fully-masked row is
    # degenerate: additive-bias masking and masked_fill then disagree).
    mask = mask.at[:, 0].set(False)

    # nn.Linear(E, E) params: uniform(-1/sqrt(E), 1/sqrt(E)), weight (out, in)
    bound = 1.0 / (E ** 0.5)
    w1 = jax.random.uniform(k_w1, (E, E), jnp.float32, -bound, bound)
    b1 = jax.random.uniform(k_b1, (E,), jnp.float32, -bound, bound)
    w2 = jax.random.uniform(k_w2, (E, E), jnp.float32, -bound, bound)
    b2 = jax.random.uniform(k_b2, (E,), jnp.float32, -bound, bound)

    out = hierarchical_brand_attention(
        cate_embedding, seq_brand_embedding, mask, w1, b1, w2, b2)
    out = jax.block_until_ready(out)

    ref = reference_forward(
        cate_embedding, seq_brand_embedding, mask, w1, b1, w2, b2)
    assert out.shape == (B, E)
    err = float(jnp.max(jnp.abs(out - ref)))
    assert jnp.allclose(out, ref, atol=1e-4, rtol=1e-4), err

    print("KERNEL_OK")
</pallas_src>

<mosaic_0001>
module attributes {stable_mosaic.version = 11 : i64} {
  func.func @hba_kernel(%arg0: i32, %arg1: memref<2x32xf32, #tpu.memory_space<vmem>>, %arg2: memref<2x8x32xf32, #tpu.memory_space<vmem>>, %arg3: memref<2x8xf32, #tpu.memory_space<vmem>>, %arg4: memref<32x32xf32, #tpu.memory_space<vmem>>, %arg5: memref<2x32xf32, #tpu.memory_space<vmem>>) attributes {dimension_semantics = [#tpu.dimension_semantics<parallel>], iteration_bounds = array<i64: 1>, scalar_prefetch = 0 : i64, scratch_operands = 0 : i64, tpu.core_type = #tpu.core_type<tc>, window_params = [{transform_indices = @transform_0, window_bounds = array<i64: 2, 32>}, {transform_indices = @transform_1, window_bounds = array<i64: 2, 8, 32>}, {transform_indices = @transform_2, window_bounds = array<i64: 2, 8>}, {pipeline_mode = #tpu.pipeline_mode<synchronous>, transform_indices = @transform_3, window_bounds = array<i64: 32, 32>}, {transform_indices = @transform_4, window_bounds = array<i64: 2, 32>}]} {
    %c0 = arith.constant 0 : index
    %c0_0 = arith.constant 0 : index
    %c0_1 = arith.constant 0 : index
    %0 = vector.load %arg2[%c0, %c0_0, %c0_1] : memref<2x8x32xf32, #tpu.memory_space<vmem>>, vector<2x8x32xf32>
    %1 = vector.shape_cast %0 : vector<2x8x32xf32> to vector<16x32xf32>
    %c0_2 = arith.constant 0 : index
    %c0_3 = arith.constant 0 : index
    %2 = vector.load %arg4[%c0_2, %c0_3] : memref<32x32xf32, #tpu.memory_space<vmem>>, vector<32x32xf32>
    %cst = arith.constant dense<0.000000e+00> : vector<16x32xf32>
    %3 = tpu.matmul %1, %2, %cst {dimension_numbers = #tpu.dot_dimension_numbers<[1], [0], [0], [1], [0, 0, 1, 1], [], []>} : vector<16x32xf32>, vector<32x32xf32>, vector<16x32xf32> -> vector<16x32xf32>
    %4 = vector.shape_cast %3 : vector<16x32xf32> to vector<2x8x32xf32>
    %c0_4 = arith.constant 0 : index
    %c0_5 = arith.constant 0 : index
    %5 = vector.load %arg1[%c0_4, %c0_5] : memref<2x32xf32, #tpu.memory_space<vmem>>, vector<2x32xf32>
    %6 = vector.shape_cast %5 : vector<2x32xf32> to vector<2x1x32xf32>
    %7 = vector.broadcast %6 : vector<2x1x32xf32> to vector<2x8x32xf32>
    %8 = arith.addf %4, %7 : vector<2x8x32xf32>
    %cst_6 = arith.constant 5.000000e-01 : f32
    %9 = vector.broadcast %cst_6 : f32 to vector<2x8x32xf32>
    %10 = arith.mulf %9, %8 : vector<2x8x32xf32>
    %11 = math.tanh %10 : vector<2x8x32xf32>
    %cst_7 = arith.constant dense<0.000000e+00> : vector<2x8xf32>
    %12 = vector.multi_reduction <add>, %11, %cst_7 [2] : vector<2x8x32xf32> to vector<2x8xf32>
    %cst_8 = arith.constant 5.000000e-01 : f32
    %13 = vector.broadcast %cst_8 : f32 to vector<2x8xf32>
    %14 = arith.mulf %13, %12 : vector<2x8xf32>
    %c0_9 = arith.constant 0 : index
    %c0_10 = arith.constant 0 : index
    %15 = vector.load %arg3[%c0_9, %c0_10] : memref<2x8xf32, #tpu.memory_space<vmem>>, vector<2x8xf32>
    %16 = arith.addf %14, %15 : vector<2x8xf32>
    %cst_11 = arith.constant dense<0xFF800000> : vector<2xf32>
    %17 = vector.multi_reduction <maximumf>, %16, %cst_11 [1] : vector<2x8xf32> to vector<2xf32>
    %18 = vector.shape_cast %17 : vector<2xf32> to vector<2x1xf32>
    %19 = vector.broadcast %18 : vector<2x1xf32> to vector<2x8xf32>
    %20 = arith.subf %16, %19 : vector<2x8xf32>
    %21 = math.exp %20 : vector<2x8xf32>
    %cst_12 = arith.constant dense<0.000000e+00> : vector<2xf32>
    %22 = vector.multi_reduction <add>, %21, %cst_12 [1] : vector<2x8xf32> to vector<2xf32>
    %23 = vector.shape_cast %22 : vector<2xf32> to vector<2x1xf32>
    %24 = vector.shape_cast %21 : vector<2x8xf32> to vector<2x8x1xf32>
    %25 = vector.broadcast %24 : vector<2x8x1xf32> to vector<2x8x32xf32>
    %26 = arith.mulf %25, %0 : vector<2x8x32xf32>
    %cst_13 = arith.constant dense<0.000000e+00> : vector<2x32xf32>
    %27 = vector.multi_reduction <add>, %26, %cst_13 [1] : vector<2x8x32xf32> to vector<2x32xf32>
    %cst_14 = arith.constant 1.000000e+00 : f32
    %28 = vector.broadcast %cst_14 : f32 to vector<2x1xf32>
    %29 = arith.divf %28, %23 : vector<2x1xf32>
    %30 = vector.broadcast %29 : vector<2x1xf32> to vector<2x32xf32>
    %31 = arith.mulf %27, %30 : vector<2x32xf32>
    %c0_15 = arith.constant 0 : index
    %c0_16 = arith.constant 0 : index
    %32 = vector.load %arg5[%c0_15, %c0_16] : memref<2x32xf32, #tpu.memory_space<vmem>>, vector<2x32xf32>
    tpu.vector_store %arg5[%c0_15, %c0_16], %31 {strides = array<i32>} : memref<2x32xf32, #tpu.memory_space<vmem>>, vector<2x32xf32>,
    return
  }
  func.func @transform_0(%arg0: i32) -> (i32, i32) {
    %c0_i32 = arith.constant 0 : i32
    %c0_i32_0 = arith.constant 0 : i32
    return %arg0, %c0_i32 : i32, i32
  }
  func.func @transform_1(%arg0: i32) -> (i32, i32, i32) {
    %c0_i32 = arith.constant 0 : i32
    %c0_i32_0 = arith.constant 0 : i32
    %c0_i32_1 = arith.constant 0 : i32
    return %arg0, %c0_i32, %c0_i32_0 : i32, i32, i32
  }
  func.func @transform_2(%arg0: i32) -> (i32, i32) {
    %c0_i32 = arith.constant 0 : i32
    %c0_i32_0 = arith.constant 0 : i32
    return %arg0, %c0_i32 : i32, i32
  }
  func.func @transform_3(%arg0: i32) -> (i32, i32) {
    %c0_i32 = arith.constant 0 : i32
    %c0_i32_0 = arith.constant 0 : i32
    %c0_i32_1 = arith.constant 0 : i32
    return %c0_i32, %c0_i32_0 : i32, i32
  }
  func.func @transform_4(%arg0: i32) -> (i32, i32) {
    %c0_i32 = arith.constant 0 : i32
    %c0_i32_0 = arith.constant 0 : i32
    return %arg0, %c0_i32 : i32, i32
  }
}

</mosaic_0001>

<llo_original>
// kernel: tpu_custom_call.1
$region0: #{tpu_custom_call.1}
  #allocation0 [shape = 'u32[]', space=smem, size = 0x4, offset = 0x4, fixed_abs, tag = 'smem constant byte address 0x4 - core index']
  #allocation1 [shape = 'u32[144,128]{1,0:T(1,128)}', space=vmem, size = 0x12000, scoped, tag = 'internal scratch']
  %s0 = inlined_call_operand.hbm [shape: f32[2,32], index: 0, kind: input, shape index: {}]
  %s1 = inlined_call_operand.hbm [shape: f32[2,8,32], index: 1, kind: input, shape index: {}]
  %s2 = inlined_call_operand.vmem [shape: f32[2,8], index: 2, kind: input, shape index: {}]
  %s3 = inlined_call_operand.hbm [shape: f32[32,32], index: 3, kind: input, shape index: {}]
  %s4 = inlined_call_operand.hbm [shape: f32[2,32], index: 4, kind: output, shape index: {}]
  %s5 = sld [smem:[#allocation0]]
  $region38: #{tpu_custom_call.1} parent=0
    _
  %s7 = ssub.s32 1, %s5
  %s8 = scalar_select 0, %s7, %s5
  $region1: #{tpu_custom_call.1} parent=0
    #allocation2 [shape = 'u8[1024]{0}', space=vmem, size = 0x400, scoped, tag = 'input window, operand 0, single buffered']
    #allocation3 [shape = 's32[1]{0}', space=sflag, size = 0x4, scoped, tag = 'scoped memory for tpu_custom_call.1']
    #allocation4 [shape = 's32[1]{0}', space=sflag, size = 0x4, scoped, tag = 'scoped memory for tpu_custom_call.1']
    #allocation5 [shape = 'u8[8192]{0}', space=vmem, size = 0x2000, scoped, tag = 'input window, operand 1, single buffered']
    #allocation6 [shape = 's32[1]{0}', space=sflag, size = 0x4, scoped, tag = 'scoped memory for tpu_custom_call.1']
    #allocation7 [shape = 'u8[16384]{0}', space=vmem, size = 0x4000, scoped, tag = 'input window, operand 3, single buffered']
    #allocation8 [shape = 'u8[1024]{0}', space=vmem, size = 0x400, scoped, tag = 'output window, operand 0, single buffered']
    %9 = vsyncpa [#allocation3], 0
    %10 = vsyncpa [#allocation6], 0
    %11 = vsyncpa [#allocation4], 0
    // Predicated region
    $region2: #{tpu_custom_call.1} parent=1 // pred_check
      _
    $region3: #{tpu_custom_call.1} parent=1 // pred_check_branch
      %13 = sbr.rel (0) target = $region5
    $region4: #{tpu_custom_call.1} parent=1 // pred_region
      %s15 = ssub.s32 32, 32
      %16 = vsyncadd [#allocation3], %s15
      %s18 = sshll.u32 [#allocation2], 4
      %s19 = int_to_ptr.vmem [resolvable:$true] %s18
      %21 = dma.hbm_to_vmem [thread:$0]  %s0, 32, %s19, [#allocation3]
    $region5: #{tpu_custom_call.1} parent=1 // pred_fallthru
      _
    // Predicated region
    $region6: #{tpu_custom_call.1} parent=1 // pred_check
      _
    $region7: #{tpu_custom_call.1} parent=1 // pred_check_branch
      %23 = sbr.rel (0) target = $region9
    $region8: #{tpu_custom_call.1} parent=1 // pred_region
      %s25 = ssub.s32 256, 256
      %26 = vsyncadd [#allocation6], %s25
      %s27 = sshll.u32 [#allocation5], 4
      %s28 = int_to_ptr.vmem [resolvable:$true] %s27
      %33 = dma.hbm_to_vmem [thread:$0]  %s1, 256, %s28, [#allocation6], 128, 128, 8
    $region9: #{tpu_custom_call.1} parent=1 // pred_fallthru
      _
    // Predicated region
    $region10: #{tpu_custom_call.1} parent=1 // pred_check
      _
    $region11: #{tpu_custom_call.1} parent=1 // pred_check_branch
      %35 = sbr.rel (0) target = $region13
    $region12: #{tpu_custom_call.1} parent=1 // pred_region
      _
    $region13: #{tpu_custom_call.1} parent=1 // pred_fallthru
      _
    // Predicated region
    $region14: #{tpu_custom_call.1} parent=1 // pred_check
      _
    $region15: #{tpu_custom_call.1} parent=1 // pred_check_branch
      %37 = sbr.rel (0) target = $region17
    $region16: #{tpu_custom_call.1} parent=1 // pred_region
      %s39 = ssub.s32 512, 512
      %40 = vsyncadd [#allocation6], %s39
      %s41 = sshll.u32 [#allocation7], 4
      %s42 = int_to_ptr.vmem [resolvable:$true] %s41
      %47 = dma.hbm_to_vmem [thread:$0]  %s3, 512, %s42, [#allocation6], 128, 128, 8
    $region17: #{tpu_custom_call.1} parent=1 // pred_fallthru
      _
    // Predicated region
    $region18: #{tpu_custom_call.1} parent=1 // pred_check
      _
    $region19: #{tpu_custom_call.1} parent=1 // pred_check_branch
      %49 = sbr.rel (0) target = $region21
    $region20: #{tpu_custom_call.1} parent=1 // pred_region
      %50 = dma.done [#allocation3], 32
    $region21: #{tpu_custom_call.1} parent=1 // pred_fallthru
      _
    // Predicated region
    $region22: #{tpu_custom_call.1} parent=1 // pred_check
      _
    $region23: #{tpu_custom_call.1} parent=1 // pred_check_branch
      %52 = sbr.rel (0) target = $region25
    $region24: #{tpu_custom_call.1} parent=1 // pred_region
      %53 = dma.done [#allocation6], 256
    $region25: #{tpu_custom_call.1} parent=1 // pred_fallthru
      _
    // Predicated region
    $region26: #{tpu_custom_call.1} parent=1 // pred_check
      _
    $region27: #{tpu_custom_call.1} parent=1 // pred_check_branch
      %55 = sbr.rel (0) target = $region29
    $region28: #{tpu_custom_call.1} parent=1 // pred_region
      %56 = dma.done [#allocation6], 512
    $region29: #{tpu_custom_call.1} parent=1 // pred_fallthru
      _
    %v57 = vld [vmem:[#allocation5] sm:$0xff]
    %v58 = vld [vmem:[#allocation5 + $0x8] sm:$0xff]
    %v59 = vld [vmem:[#allocation7] sm:$0xff]
    %v60 = vld [vmem:[#allocation7 + $0x8] sm:$0xff]
    %v61 = vld [vmem:[#allocation7 + $0x10] sm:$0xff]
    %v62 = vld [vmem:[#allocation7 + $0x18] sm:$0xff]
    %vm63 = vcmask 261120
    %v65 = vsel %vm63, %v57, 0
    %v68 = vsel %vm63, %v58, 0
    %70 = vmatprep.subr.mxu0 0.0
    %71 = vmatpush1.msra.mxu0 %v59
    %72 = vmatprep.subr.mxu0 0.0
    %73 = vmatpush1.msra.mxu0 %v60
    %74 = vmatprep.subr.mxu0 0.0
    %75 = vmatpush1.msra.mxu0 %v61
    %76 = vmatprep.subr.mxu0 0.0
    %77 = vmatpush1.msra.mxu0 %v62
    %78 = vmatprep.subr.mxu0 0.0
    %79 = vmatpush1.msra.mxu0 0.0
    %80 = vmatprep.subr.mxu0 0.0
    %81 = vmatpush1.msra.mxu0 0.0
    %82 = vmatprep.subr.mxu0 0.0
    %83 = vmatpush1.msra.mxu0 0.0
    %84 = vmatprep.subr.mxu0 0.0
    %85 = vmatpush1.msra.mxu0 0.0
    %86 = vmatprep.subr.mxu0 0.0
    %87 = vmatpush1.msra.mxu0 0.0
    %88 = vmatprep.subr.mxu0 0.0
    %89 = vmatpush1.msra.mxu0 0.0
    %90 = vmatprep.subr.mxu0 0.0
    %91 = vmatpush1.msra.mxu0 0.0
    %92 = vmatprep.subr.mxu0 0.0
    %93 = vmatpush1.msra.mxu0 0.0
    %94 = vmatprep.subr.mxu0 0.0
    %95 = vmatpush1.msra.mxu0 0.0
    %96 = vmatprep.subr.mxu0 0.0
    %97 = vmatpush1.msra.mxu0 0.0
    %98 = vmatprep.subr.mxu0 0.0
    %99 = vmatpush1.msra.mxu0 0.0
    %100 = vmatprep.subr.mxu0 0.0
    %101 = vmatpush1.msra.mxu0 0.0
    %102 = vmatprep.subr.mxu0 0.0
    %103 = vmatpush1.msra.mxu0 0.0
    %104 = vmatprep.subr.mxu0 0.0
    %105 = vmatpush1.msra.mxu0 0.0
    %106 = vmatprep.subr.mxu0 0.0
    %107 = vmatpush1.msra.mxu0 0.0
    %108 = vmatprep.subr.mxu0 0.0
    %109 = vmatpush1.msra.mxu0 0.0
    %110 = vmatprep.subr.mxu0 0.0
    %111 = vmatpush1.msra.mxu0 0.0
    %112 = vmatprep.subr.mxu0 0.0
    %113 = vmatpush1.msra.mxu0 0.0
    %114 = vmatprep.subr.mxu0 0.0
    %115 = vmatpush1.msra.mxu0 0.0
    %116 = vmatprep.subr.mxu0 0.0
    %117 = vmatpush1.msra.mxu0 0.0
    %118 = vmatprep.subr.mxu0 0.0
    %119 = vmatpush1.msra.mxu0 0.0
    %120 = vmatprep.subr.mxu0 0.0
    %121 = vmatpush1.msra.mxu0 0.0
    %122 = vmatprep.subr.mxu0 0.0
    %123 = vmatpush1.msra.mxu0 0.0
    %124 = vmatprep.subr.mxu0 0.0
    %125 = vmatpush1.msra.mxu0 0.0
    %126 = vmatprep.subr.mxu0 0.0
    %127 = vmatpush1.msra.mxu0 0.0
    %128 = vmatprep.subr.mxu0 0.0
    %129 = vmatpush1.msra.mxu0 0.0
    %130 = vmatprep.subr.mxu0 0.0
    %131 = vmatpush1.msra.mxu0 0.0
    %132 = vmatprep.subr.mxu0 0.0
    %133 = vmatpush1.msra.mxu0 0.0
    %134 = vmatprep.mubr.f32.mxu0 0.0
    %135 = vmatmul.mubr.f32.gmra.mrb[0].mxu0 %v65
    %v136 = vpop.f32.mrb[0].mxu0
    %v137 = vadd.f32 0.0, %v136
    %v138 = vpop.f32.mrb[0].mxu0
    %139 = vmatprep.mubr.f32.mxu0 0.0
    %140 = vmatmul.mubr.f32.gmra.mrb[0].mxu0 %v68
    %v141 = vpop.f32.mrb[0].mxu0
    %v142 = vadd.f32 0.0, %v141
    %v143 = vpop.f32.mrb[0].mxu0
    %144 = vdwg.mxu0
    %v145 = vld [vmem:[#allocation2] sm:$0x3]
    %v148 = vunpack.c.l.s4 1966171168
    %v149 = vunpack.c.0.s8 %v148
    %v150 = vlaneseq
    %v151 = vshrl.u32 %v150, 7
    %v152 = vsub.s32 %v149, %v151
    %v153 = vrot.slane %v145, %v152
    %v154 = vcombine.high %v153, %v153
    %v156 = vunpack.c.l.s4 1966171168
    %v157 = vunpack.c.0.s8 %v156
    %v158 = vlaneseq
    %v159 = vshrl.u32 %v158, 7
    %v160 = vsub.s32 %v157, %v159
    %v161 = vrot.slane %v153, %v160
    %v163 = vunpack.c.l.s4 1966171168
    %v164 = vunpack.c.0.s8 %v163
    %v165 = vlaneseq
    %v166 = vshrl.u32 %v165, 7
    %v167 = vsub.s32 %v164, %v166
    %v168 = vrot.slane %v154, %v167
    %v169 = vlaneseq
    %v170 = vshrl.u32 %v169, 7
    %v171 = vsub.s32 0, %v170
    %v172 = vrot.slane %v161, %v171
    %v173 = vlaneseq
    %v174 = vshrl.u32 %v173, 7
    %v175 = vsub.s32 0, %v174
    %v176 = vrot.slane %v168, %v175
    %v179 = vadd.f32 %v137, %v172
    %v180 = vadd.f32 %v142, %v176
    %v181 = vmul.f32 %v179, 0.5
    %v182 = vmul.f32 %v180, 0.5
    %v183 = vtanh.pop %v181
    %v184 = vtanh.pop %v182
    %v185 = vsel %vm63, %v183, 0.0
    %186 = vadd.xlane.f32.xlu0 %v185
    %v187 = vpop.xlane.xlu0 %186
    %v188 = vsel %vm63, %v184, 0.0
    %189 = vadd.xlane.f32.xlu0 %v188
    %v190 = vpop.xlane.xlu0 %189
    %v191 = vmul.f32 %v187, 0.5
    %v192 = vmul.f32 %v190, 0.5
    %v193 = vld [vmem:[%s2] sm:$0x3]
    %v195 = vlaneseq
    %v196 = vshrl.u32 %v195, 7
    %v197 = vsub.s32 0, %v196
    %v198 = vrot.slane %v193, %v197
    %200 = vbcast.lane.b32.xlu0 %v198, 256
    %v201 = vpop.permute.xlu0 %200
    %v202 = vlaneseq
    %v203 = vshrl.u32 %v202, 7
    %v204 = vsub.s32 1, %v203
    %v205 = vrot.slane %v193, %v204
    %207 = vbcast.lane.b32.xlu0 %v205, 256
    %v208 = vpop.permute.xlu0 %207
    %v211 = vadd.f32 %v191, %v201
    %v212 = vadd.f32 %v192, %v208
    %215 = vset.pattern.permute.xlu0 0
    %216 = vperm.xlu0 %215, %v211
    %v217 = vpop.permute.xlu0 %216
    %218 = vset.pattern.permute.xlu0 0
    %219 = vperm.xlu0 %218, %v212
    %v220 = vpop.permute.xlu0 %219
    %v221 = vlaneseq
    %v222 = vand.u32 %v221, 127
    %v223 = vlaneseq
    %v224 = vshrl.u32 %v223, 7
    %v225 = vsub.s32 %v222, %v224
    %v226 = vrot.slane %v217, %v225
    %v227 = vlaneseq
    %v228 = vshrl.u32 %v227, 7
    %v229 = vsub.s32 %v222, %v228
    %v230 = vrot.slane %v220, %v229
    %vm231 = vcmask 1041409
    %v232 = vsel %vm231, %v230, %v226
    %vm234 = vcmask 58368
    %v235 = vsel %vm234, %v232, -inf
    %236 = vmax.xlane.f32.xlu0 %v235
    %v237 = vpop.xlane.xlu0 %236
    %v239 = vlaneseq
    %v240 = vshrl.u32 %v239, 7
    %v241 = vsub.s32 0, %v240
    %v242 = vrot.slane %v237, %v241
    %v243 = vlaneseq
    %v244 = vshrl.u32 %v243, 7
    %v245 = vsub.s32 1, %v244
    %v246 = vrot.slane %v237, %v245
    %v249 = vsub.f32 %v211, %v242
    %v250 = vsub.f32 %v212, %v246
    %v251 = vmul.f32 %v249, 1.442695
    %v252 = vpow.pop %v251
    %v253 = vmul.f32 %v250, 1.442695
    %v254 = vpow.pop %v253
    %257 = vset.pattern.permute.xlu0 0
    %258 = vperm.xlu0 %257, %v252
    %v259 = vpop.permute.xlu0 %258
    %260 = vset.pattern.permute.xlu0 0
    %261 = vperm.xlu0 %260, %v254
    %v262 = vpop.permute.xlu0 %261
    %v263 = vlaneseq
    %v264 = vshrl.u32 %v263, 7
    %v265 = vsub.s32 %v222, %v264
    %v266 = vrot.slane %v259, %v265
    %v267 = vlaneseq
    %v268 = vshrl.u32 %v267, 7
    %v269 = vsub.s32 %v222, %v268
    %v270 = vrot.slane %v262, %v269
    %v271 = vsel %vm231, %v270, %v266
    %v273 = vsel %vm234, %v271, 0.0
    %274 = vadd.xlane.f32.xlu0 %v273
    %v275 = vpop.xlane.xlu0 %274
    %v278 = vmul.f32 %v259, %v57
    %v279 = vmul.f32 %v262, %v58
    %v280 = vsel %vm63, %v278, 0.0
    %v281 = vrot.slane %v280, 4
    %v282 = vadd.f32 %v280, %v281
    %v283 = vrot.slane %v282, 2
    %v284 = vadd.f32 %v282, %v283
    %v285 = vrot.slane %v284, 1
    %v286 = vadd.f32 %v284, %v285
    %v287 = vsel %vm63, %v279, 0.0
    %v288 = vrot.slane %v287, 4
    %v289 = vadd.f32 %v287, %v288
    %v290 = vrot.slane %v289, 2
    %v291 = vadd.f32 %v289, %v290
    %v292 = vrot.slane %v291, 1
    %v293 = vadd.f32 %v291, %v292
    %v294 = vrcp.pop %v275
    %v295 = vmul.f32 1.0, %v294
    %v297 = vrot.slane %v295, 1
    %v300 = vmul.f32 %v286, %v295
    %v301 = vmul.f32 %v293, %v297
    %v304 = vrot.slane %v301, 7
    %v305 = vsel %vm231, %v304, %v300
    %vm307 = vcmask 254976
    %308 = vst.msk [vmem:[#allocation8] sm:$0x3] %vm307, %v305
    // Predicated region
    $region30: #{tpu_custom_call.1} parent=1 // pred_check
      _
    $region31: #{tpu_custom_call.1} parent=1 // pred_check_branch
      %310 = sbr.rel (0) target = $region33
    $region32: #{tpu_custom_call.1} parent=1 // pred_region
      %s312 = ssub.s32 32, 32
      %313 = vsyncadd [#allocation4], %s312
      %s315 = sshll.u32 [#allocation8], 4
      %s316 = int_to_ptr.vmem [resolvable:$true] %s315
      %318 = dma.vmem_to_hbm [thread:$0]  %s316, 32, %s4, [#allocation4]
    $region33: #{tpu_custom_call.1} parent=1 // pred_fallthru
      _
    // Predicated region
    $region34: #{tpu_custom_call.1} parent=1 // pred_check
      _
    $region35: #{tpu_custom_call.1} parent=1 // pred_check_branch
      %320 = sbr.rel (0) target = $region37
    $region36: #{tpu_custom_call.1} parent=1 // pred_region
      %321 = dma.done [#allocation4], 32
    $region37: #{tpu_custom_call.1} parent=1 // pred_fallthru
      _
    %322 = vsyncpa [#allocation3], 1
    %323 = vsyncpa [#allocation6], 1
    %324 = vsyncpa [#allocation4], 1

</llo_original>
